<compile_context>
chip_gen: v5e
topology: v5e:2x2
jax: 0.10.0
libtpu: 0.0.40
codegen_flags: <defaults>
</compile_context>

<pallas_src>
import functools

import jax
import jax.numpy as jnp
from jax.experimental import pallas as pl
from jax.experimental.pallas import tpu as pltpu

HIDDEN = 200        # logical hidden size (PyTorch spec)
HIDDEN_PAD = 256    # hidden padded to a multiple of 128 lanes (zero-filled)
LANE = 128
SUBLANE = 16        # bf16 sublane packing -> batch tiles kept multiples of 16


def _round_up(x, m):
    return (x + m - 1) // m * m


def _cdiv(a, b):
    return -(-a // b)


def detect_num_cores():
    """Best-effort TensorCores-per-device count (v7x / megacore -> 2)."""
    try:
        d = jax.devices()[0]
        n = getattr(d, "num_cores", None)
        if n:
            return int(n)
        kind = str(getattr(d, "device_kind", "")).lower()
        if "v7" in kind:
            return 2
    except Exception:
        pass
    return 1


def _pamlp_kernel(x_ref, w1_ref, b1_ref, w2_ref, b2_ref, w3_ref, b3_ref, o_ref):
    # x_ref: (TB, K2) f32 tile; weights bf16 (in, out); biases f32 (1, out).
    # MXU gets bf16 operands with f32 accumulation; elementwise path stays f32.
    x = x_ref[...].astype(jnp.bfloat16)

    # hidden_layer_1 + ReLU
    z = jnp.dot(x, w1_ref[...], preferred_element_type=jnp.float32) + b1_ref[...]
    z = jnp.maximum(z, 0.0)

    # hidden_layer_2 + ReLU
    z = jnp.dot(z.astype(jnp.bfloat16), w2_ref[...],
                preferred_element_type=jnp.float32) + b2_ref[...]
    z = jnp.maximum(z, 0.0)

    # hidden_layer_3 + Sigmoid
    z = jnp.dot(z.astype(jnp.bfloat16), w3_ref[...],
                preferred_element_type=jnp.float32) + b3_ref[...]
    o_ref[...] = jax.nn.sigmoid(z).astype(o_ref.dtype)   # lane-dense bf16 store


def prepare_params(w1, b1, w2, b2, w3, b3):
    """Pad (zero-fill) + cast weights to bf16 ONCE, outside the hot path.

    w*: (in, out) f32, b*: (out,) f32.  Output dims are padded to multiples of
    128 lanes; the input dim of W1 stays at K*K so x can be passed unpadded."""
    k2, h = w1.shape
    assert h == HIDDEN and w2.shape == (HIDDEN, HIDDEN) and w3.shape[0] == HIDDEN
    k = w3.shape[1]
    out_pad = _round_up(k, LANE)

    w1p = (jnp.zeros((k2, HIDDEN_PAD), jnp.float32)
           .at[:, :HIDDEN].set(w1).astype(jnp.bfloat16))
    w2p = (jnp.zeros((HIDDEN_PAD, HIDDEN_PAD), jnp.float32)
           .at[:HIDDEN, :HIDDEN].set(w2).astype(jnp.bfloat16))
    w3p = (jnp.zeros((HIDDEN_PAD, out_pad), jnp.float32)
           .at[:HIDDEN, :k].set(w3).astype(jnp.bfloat16))
    b1p = jnp.zeros((1, HIDDEN_PAD), jnp.float32).at[0, :HIDDEN].set(b1)
    b2p = jnp.zeros((1, HIDDEN_PAD), jnp.float32).at[0, :HIDDEN].set(b2)
    b3p = jnp.zeros((1, out_pad), jnp.float32).at[0, :k].set(b3)
    return w1p, b1p, w2p, b2p, w3p, b3p


@functools.partial(jax.jit, static_argnames=("k", "tile_b", "num_cores"))
def pamlp_forward(csi, w1p, b1p, w2p, b2p, w3p, b3p, *, k, tile_b=2048,
                  num_cores=1):
    """csi: (B, K, K) or (B, K*K) f32; params from prepare_params().

    Returns (B, K) f32, matching PyTorch PAMLP.forward semantics."""
    assert tile_b % SUBLANE == 0, "tile_b must be a multiple of 16 (bf16 sublane)"

    B = csi.shape[0]
    x = csi.reshape(B, -1)                     # csi.view(csi.size(0), -1)
    k2 = x.shape[1]
    assert w1p.shape[0] == k2, "W1 input dim must match K*K"
    out_pad = w3p.shape[1]

    # ---- batch tile selection -------------------------------------------------
    # Single TC (v5e/v6e): fewest, largest tiles.  Multi-TC (v7x/megacore):
    # step count is a multiple of num_cores so the parallel axis balances.
    if num_cores > 1 and B > SUBLANE:
        per_core = _cdiv(B, num_cores)
        steps_per_core = max(1, _cdiv(per_core, tile_b))
        tb = min(tile_b, _round_up(_cdiv(per_core, steps_per_core), SUBLANE))
        n_steps = num_cores * steps_per_core
    else:
        tb = min(tile_b, _round_up(B, SUBLANE))
        n_steps = _cdiv(B, tb)
    b_pad = n_steps * tb

    # Pad only the batch axis, and only when the tiling requires it.
    if b_pad != B:
        x = jnp.pad(x, ((0, b_pad - B), (0, 0)))

    # Advisory cost estimate with logical (unpadded) dims.
    flops = 2 * B * (k2 * HIDDEN + HIDDEN * HIDDEN + HIDDEN * k)
    bytes_accessed = (x.size * x.dtype.itemsize
                      + b_pad * out_pad * 2
                      + sum(int(a.size) * a.dtype.itemsize
                            for a in (w1p, b1p, w2p, b2p, w3p, b3p)))

    out = pl.pallas_call(
        _pamlp_kernel,
        out_shape=jax.ShapeDtypeStruct((b_pad, out_pad), jnp.bfloat16),
        grid_spec=pltpu.PrefetchScalarGridSpec(
            num_scalar_prefetch=0,
            grid=(n_steps,),
            in_specs=[
                pl.BlockSpec((tb, k2), lambda i: (i, 0)),                  # x tile
                pl.BlockSpec((k2, HIDDEN_PAD), lambda i: (0, 0)),          # W1
                pl.BlockSpec((1, HIDDEN_PAD), lambda i: (0, 0)),           # b1
                pl.BlockSpec((HIDDEN_PAD, HIDDEN_PAD), lambda i: (0, 0)),  # W2
                pl.BlockSpec((1, HIDDEN_PAD), lambda i: (0, 0)),           # b2
                pl.BlockSpec((HIDDEN_PAD, out_pad), lambda i: (0, 0)),     # W3
                pl.BlockSpec((1, out_pad), lambda i: (0, 0)),              # b3
            ],
            out_specs=pl.BlockSpec((tb, out_pad), lambda i: (i, 0)),
        ),
        compiler_params=pltpu.CompilerParams(
            dimension_semantics=("parallel",)),
        cost_estimate=pl.CostEstimate(
            flops=flops,
            transcendentals=B * k,
            bytes_accessed=bytes_accessed),
    )(x, w1p, b1p, w2p, b2p, w3p, b3p)

    # slice away batch / output-lane padding, restore f32
    return out[:B, :k].astype(jnp.float32)


def init_params(key, K):
    """Deterministic PyTorch-style init: U(-1/sqrt(fan_in), 1/sqrt(fan_in)).
    Weights returned pre-transposed as (in, out) f32."""
    ks = jax.random.split(key, 6)

    def linear(kw, kb, fan_in, fan_out):
        bound = 1.0 / jnp.sqrt(fan_in)
        w = jax.random.uniform(kw, (fan_in, fan_out), jnp.float32, -bound, bound)
        b = jax.random.uniform(kb, (fan_out,), jnp.float32, -bound, bound)
        return w, b

    w1, b1 = linear(ks[0], ks[1], K * K, HIDDEN)
    w2, b2 = linear(ks[2], ks[3], HIDDEN, HIDDEN)
    w3, b3 = linear(ks[4], ks[5], HIDDEN, K)
    return w1, b1, w2, b2, w3, b3


def pamlp_reference(csi, w1, b1, w2, b2, w3, b3):
    x = csi.reshape(csi.shape[0], -1)
    z = jnp.maximum(x @ w1 + b1, 0.0)
    z = jnp.maximum(z @ w2 + b2, 0.0)
    return jax.nn.sigmoid(z @ w3 + b3)


if __name__ == "__main__":
    K = 8            # PAMLP(K): input K*K=64, output K=8
    B = 64           # small demo batch

    key = jax.random.PRNGKey(0)
    k_in, k_param = jax.random.split(key)

    csi = jax.random.normal(k_in, (B, K, K), dtype=jnp.float32)
    params = init_params(k_param, K)
    padded = prepare_params(*params)            # pad/cast weights ONCE

    num_cores = detect_num_cores()
    out = pamlp_forward(csi, *padded, k=K, num_cores=num_cores)
    out = jax.block_until_ready(out)

    ref = pamlp_reference(csi, *params)
    assert out.shape == (B, K)
    # bf16 MXU operands / bf16 output store -> slightly looser tolerance
    assert jnp.allclose(out, ref, atol=2e-2, rtol=2e-2), "mismatch vs reference"

    print("KERNEL_OK")
</pallas_src>

<mosaic_0001>
module attributes {stable_mosaic.version = 11 : i64} {
  func.func @_pamlp_kernel(%arg0: i32, %arg1: memref<64x64xf32, #tpu.memory_space<vmem>>, %arg2: memref<64x256xbf16, #tpu.memory_space<vmem>>, %arg3: memref<1x256xf32, #tpu.memory_space<vmem>>, %arg4: memref<256x256xbf16, #tpu.memory_space<vmem>>, %arg5: memref<1x256xf32, #tpu.memory_space<vmem>>, %arg6: memref<256x128xbf16, #tpu.memory_space<vmem>>, %arg7: memref<1x128xf32, #tpu.memory_space<vmem>>, %arg8: memref<64x128xbf16, #tpu.memory_space<vmem>>) attributes {dimension_semantics = [#tpu.dimension_semantics<parallel>], iteration_bounds = array<i64: 1>, scalar_prefetch = 0 : i64, scratch_operands = 0 : i64, tpu.core_type = #tpu.core_type<tc>, window_params = [{transform_indices = @transform_0, window_bounds = array<i64: 64, 64>}, {pipeline_mode = #tpu.pipeline_mode<synchronous>, transform_indices = @transform_1, window_bounds = array<i64: 64, 256>}, {pipeline_mode = #tpu.pipeline_mode<synchronous>, transform_indices = @transform_2, window_bounds = array<i64: 1, 256>}, {pipeline_mode = #tpu.pipeline_mode<synchronous>, transform_indices = @transform_3, window_bounds = array<i64: 256, 256>}, {pipeline_mode = #tpu.pipeline_mode<synchronous>, transform_indices = @transform_4, window_bounds = array<i64: 1, 256>}, {pipeline_mode = #tpu.pipeline_mode<synchronous>, transform_indices = @transform_5, window_bounds = array<i64: 256, 128>}, {pipeline_mode = #tpu.pipeline_mode<synchronous>, transform_indices = @transform_6, window_bounds = array<i64: 1, 128>}, {transform_indices = @transform_7, window_bounds = array<i64: 64, 128>}]} {
    %c0 = arith.constant 0 : index
    %c0_0 = arith.constant 0 : index
    %0 = vector.load %arg1[%c0, %c0_0] : memref<64x64xf32, #tpu.memory_space<vmem>>, vector<64x64xf32>
    %1 = arith.truncf %0 : vector<64x64xf32> to vector<64x64xbf16>
    %c0_1 = arith.constant 0 : index
    %c0_2 = arith.constant 0 : index
    %2 = vector.load %arg2[%c0_1, %c0_2] : memref<64x256xbf16, #tpu.memory_space<vmem>>, vector<64x256xbf16>
    %cst = arith.constant dense<0.000000e+00> : vector<64x256xf32>
    %3 = tpu.matmul %1, %2, %cst {dimension_numbers = #tpu.dot_dimension_numbers<[1], [0], [0], [1], [0, 0, 1, 1], [], []>} : vector<64x64xbf16>, vector<64x256xbf16>, vector<64x256xf32> -> vector<64x256xf32>
    %c0_3 = arith.constant 0 : index
    %c0_4 = arith.constant 0 : index
    %4 = vector.load %arg3[%c0_3, %c0_4] : memref<1x256xf32, #tpu.memory_space<vmem>>, vector<1x256xf32>
    %5 = vector.broadcast %4 : vector<1x256xf32> to vector<64x256xf32>
    %6 = arith.addf %3, %5 : vector<64x256xf32>
    %cst_5 = arith.constant 0.000000e+00 : f32
    %7 = vector.broadcast %cst_5 : f32 to vector<64x256xf32>
    %8 = arith.maximumf %6, %7 : vector<64x256xf32>
    %9 = arith.truncf %8 : vector<64x256xf32> to vector<64x256xbf16>
    %c0_6 = arith.constant 0 : index
    %c0_7 = arith.constant 0 : index
    %10 = vector.load %arg4[%c0_6, %c0_7] : memref<256x256xbf16, #tpu.memory_space<vmem>>, vector<256x256xbf16>
    %cst_8 = arith.constant dense<0.000000e+00> : vector<64x256xf32>
    %11 = tpu.matmul %9, %10, %cst_8 {dimension_numbers = #tpu.dot_dimension_numbers<[1], [0], [0], [1], [0, 0, 1, 1], [], []>} : vector<64x256xbf16>, vector<256x256xbf16>, vector<64x256xf32> -> vector<64x256xf32>
    %c0_9 = arith.constant 0 : index
    %c0_10 = arith.constant 0 : index
    %12 = vector.load %arg5[%c0_9, %c0_10] : memref<1x256xf32, #tpu.memory_space<vmem>>, vector<1x256xf32>
    %13 = vector.broadcast %12 : vector<1x256xf32> to vector<64x256xf32>
    %14 = arith.addf %11, %13 : vector<64x256xf32>
    %cst_11 = arith.constant 0.000000e+00 : f32
    %15 = vector.broadcast %cst_11 : f32 to vector<64x256xf32>
    %16 = arith.maximumf %14, %15 : vector<64x256xf32>
    %17 = arith.truncf %16 : vector<64x256xf32> to vector<64x256xbf16>
    %c0_12 = arith.constant 0 : index
    %c0_13 = arith.constant 0 : index
    %18 = vector.load %arg6[%c0_12, %c0_13] : memref<256x128xbf16, #tpu.memory_space<vmem>>, vector<256x128xbf16>
    %cst_14 = arith.constant dense<0.000000e+00> : vector<64x128xf32>
    %19 = tpu.matmul %17, %18, %cst_14 {dimension_numbers = #tpu.dot_dimension_numbers<[1], [0], [0], [1], [0, 0, 1, 1], [], []>} : vector<64x256xbf16>, vector<256x128xbf16>, vector<64x128xf32> -> vector<64x128xf32>
    %c0_15 = arith.constant 0 : index
    %c0_16 = arith.constant 0 : index
    %20 = vector.load %arg7[%c0_15, %c0_16] : memref<1x128xf32, #tpu.memory_space<vmem>>, vector<1x128xf32>
    %21 = vector.broadcast %20 : vector<1x128xf32> to vector<64x128xf32>
    %22 = arith.addf %19, %21 : vector<64x128xf32>
    %23 = arith.negf %22 : vector<64x128xf32>
    %24 = math.exp %23 : vector<64x128xf32>
    %cst_17 = arith.constant 1.000000e+00 : f32
    %25 = vector.broadcast %cst_17 : f32 to vector<64x128xf32>
    %26 = arith.addf %25, %24 : vector<64x128xf32>
    %27 = arith.divf %25, %26 : vector<64x128xf32>
    %28 = arith.truncf %27 : vector<64x128xf32> to vector<64x128xbf16>
    %c0_18 = arith.constant 0 : index
    %c0_19 = arith.constant 0 : index
    %29 = vector.load %arg8[%c0_18, %c0_19] : memref<64x128xbf16, #tpu.memory_space<vmem>>, vector<64x128xbf16>
    tpu.vector_store %arg8[%c0_18, %c0_19], %28 {strides = array<i32>} : memref<64x128xbf16, #tpu.memory_space<vmem>>, vector<64x128xbf16>,
    return
  }
  func.func @transform_0(%arg0: i32) -> (i32, i32) {
    %c0_i32 = arith.constant 0 : i32
    %c0_i32_0 = arith.constant 0 : i32
    return %arg0, %c0_i32 : i32, i32
  }
  func.func @transform_1(%arg0: i32) -> (i32, i32) {
    %c0_i32 = arith.constant 0 : i32
    %c0_i32_0 = arith.constant 0 : i32
    %c0_i32_1 = arith.constant 0 : i32
    return %c0_i32, %c0_i32_0 : i32, i32
  }
  func.func @transform_2(%arg0: i32) -> (i32, i32) {
    %c0_i32 = arith.constant 0 : i32
    %c0_i32_0 = arith.constant 0 : i32
    %c0_i32_1 = arith.constant 0 : i32
    return %c0_i32, %c0_i32_0 : i32, i32
  }
  func.func @transform_3(%arg0: i32) -> (i32, i32) {
    %c0_i32 = arith.constant 0 : i32
    %c0_i32_0 = arith.constant 0 : i32
    %c0_i32_1 = arith.constant 0 : i32
    return %c0_i32, %c0_i32_0 : i32, i32
  }
  func.func @transform_4(%arg0: i32) -> (i32, i32) {
    %c0_i32 = arith.constant 0 : i32
    %c0_i32_0 = arith.constant 0 : i32
    %c0_i32_1 = arith.constant 0 : i32
    return %c0_i32, %c0_i32_0 : i32, i32
  }
  func.func @transform_5(%arg0: i32) -> (i32, i32) {
    %c0_i32 = arith.constant 0 : i32
    %c0_i32_0 = arith.constant 0 : i32
    %c0_i32_1 = arith.constant 0 : i32
    return %c0_i32, %c0_i32_0 : i32, i32
  }
  func.func @transform_6(%arg0: i32) -> (i32, i32) {
    %c0_i32 = arith.constant 0 : i32
    %c0_i32_0 = arith.constant 0 : i32
    %c0_i32_1 = arith.constant 0 : i32
    return %c0_i32, %c0_i32_0 : i32, i32
  }
  func.func @transform_7(%arg0: i32) -> (i32, i32) {
    %c0_i32 = arith.constant 0 : i32
    %c0_i32_0 = arith.constant 0 : i32
    return %arg0, %c0_i32 : i32, i32
  }
}

</mosaic_0001>

<llo_original>
// kernel: pamlp_forward.1
$region0: #{pamlp_forward.1}
  #allocation0 [shape = 'u32[]', space=smem, size = 0x4, offset = 0x4, fixed_abs, tag = 'smem constant byte address 0x4 - core index']
  #allocation1 [shape = 'u32[72,128]{1,0:T(1,128)}', space=vmem, size = 0x9000, scoped, tag = 'internal scratch']
  %s0 = inlined_call_operand.vmem [shape: f32[64,64], index: 0, kind: input, shape index: {}]
  %s1 = inlined_call_operand.hbm [shape: bf16[64,256], index: 1, kind: input, shape index: {}]
  %s2 = inlined_call_operand.vmem [shape: f32[1,256], index: 2, kind: input, shape index: {}]
  %s3 = inlined_call_operand.hbm [shape: bf16[256,256], index: 3, kind: input, shape index: {}]
  %s4 = inlined_call_operand.vmem [shape: f32[1,256], index: 4, kind: input, shape index: {}]
  %s5 = inlined_call_operand.vmem [shape: bf16[256,128], index: 5, kind: input, shape index: {}]
  %s6 = inlined_call_operand.vmem [shape: f32[1,128], index: 6, kind: input, shape index: {}]
  %s7 = inlined_call_operand.vmem [shape: bf16[64,128], index: 7, kind: output, shape index: {}]
  %s8 = sld [smem:[#allocation0]]
  $region46: #{pamlp_forward.1} parent=0
    _
  %s10 = ssub.s32 1, %s8
  %s11 = scalar_select 0, %s10, %s8
  $region1: #{pamlp_forward.1} parent=0
    #allocation2 [shape = 'u8[32768]{0}', space=vmem, size = 0x8000, scoped, tag = 'input window, operand 1, single buffered']
    #allocation3 [shape = 's32[1]{0}', space=sflag, size = 0x4, scoped, tag = 'scoped memory for pamlp_forward.1']
    #allocation4 [shape = 'u8[131072]{0}', space=vmem, size = 0x20000, scoped, tag = 'input window, operand 3, single buffered']
    #allocation5 [shape = 's32[1]{0}', space=sflag, size = 0x4, scoped, tag = 'scoped memory for pamlp_forward.1']
    %12 = vsyncpa [#allocation3], 0
    %13 = vsyncpa [#allocation5], 0
    // Predicated region
    $region2: #{pamlp_forward.1} parent=1 // pred_check
      _
    $region3: #{pamlp_forward.1} parent=1 // pred_check_branch
      %15 = sbr.rel (0) target = $region5
    $region4: #{pamlp_forward.1} parent=1 // pred_region
      _
    $region5: #{pamlp_forward.1} parent=1 // pred_fallthru
      _
    // Predicated region
    $region6: #{pamlp_forward.1} parent=1 // pred_check
      _
    $region7: #{pamlp_forward.1} parent=1 // pred_check_branch
      %17 = sbr.rel (0) target = $region9
    $region8: #{pamlp_forward.1} parent=1 // pred_region
      %19 = vsyncadd [#allocation3], 0
      %s20 = sshll.u32 %s1, 4
      %s21 = int_to_ptr.hbm [resolvable:$true] %s20
      %s22 = sshll.u32 [#allocation2], 4
      %s23 = int_to_ptr.vmem [resolvable:$true] %s22
      %28 = dma.hbm_to_vmem [thread:$0]  %s21, 1024, %s23, [#allocation3], 128, 128, 8
    $region9: #{pamlp_forward.1} parent=1 // pred_fallthru
      _
    // Predicated region
    $region10: #{pamlp_forward.1} parent=1 // pred_check
      _
    $region11: #{pamlp_forward.1} parent=1 // pred_check_branch
      %30 = sbr.rel (0) target = $region13
    $region12: #{pamlp_forward.1} parent=1 // pred_region
      _
    $region13: #{pamlp_forward.1} parent=1 // pred_fallthru
      _
    // Predicated region
    $region14: #{pamlp_forward.1} parent=1 // pred_check
      _
    $region15: #{pamlp_forward.1} parent=1 // pred_check_branch
      %32 = sbr.rel (0) target = $region17
    $region16: #{pamlp_forward.1} parent=1 // pred_region
      %34 = vsyncadd [#allocation5], 0
      %s35 = sshll.u32 %s3, 4
      %s36 = int_to_ptr.hbm [resolvable:$true] %s35
      %s37 = sshll.u32 [#allocation4], 4
      %s38 = int_to_ptr.vmem [resolvable:$true] %s37
      %43 = dma.hbm_to_vmem [thread:$0]  %s36, 4096, %s38, [#allocation5], 128, 128, 8
    $region17: #{pamlp_forward.1} parent=1 // pred_fallthru
      _
    // Predicated region
    $region18: #{pamlp_forward.1} parent=1 // pred_check
      _
    $region19: #{pamlp_forward.1} parent=1 // pred_check_branch
      %45 = sbr.rel (0) target = $region21
    $region20: #{pamlp_forward.1} parent=1 // pred_region
      _
    $region21: #{pamlp_forward.1} parent=1 // pred_fallthru
      _
    // Predicated region
    $region22: #{pamlp_forward.1} parent=1 // pred_check
      _
    $region23: #{pamlp_forward.1} parent=1 // pred_check_branch
      %47 = sbr.rel (0) target = $region25
    $region24: #{pamlp_forward.1} parent=1 // pred_region
      _
    $region25: #{pamlp_forward.1} parent=1 // pred_fallthru
      _
    // Predicated region
    $region26: #{pamlp_forward.1} parent=1 // pred_check
      _
    $region27: #{pamlp_forward.1} parent=1 // pred_check_branch
      %49 = sbr.rel (0) target = $region29
    $region28: #{pamlp_forward.1} parent=1 // pred_region
      _
    $region29: #{pamlp_forward.1} parent=1 // pred_fallthru
      _
    // Predicated region
    $region30: #{pamlp_forward.1} parent=1 // pred_check
      _
    $region31: #{pamlp_forward.1} parent=1 // pred_check_branch
      %51 = sbr.rel (0) target = $region33
    $region32: #{pamlp_forward.1} parent=1 // pred_region
      %53 = dma.done [#allocation3], 1024
    $region33: #{pamlp_forward.1} parent=1 // pred_fallthru
      _
    // Predicated region
    $region34: #{pamlp_forward.1} parent=1 // pred_check
      _
    $region35: #{pamlp_forward.1} parent=1 // pred_check_branch
      %55 = sbr.rel (0) target = $region37
    $region36: #{pamlp_forward.1} parent=1 // pred_region
      %57 = dma.done [#allocation5], 4096
    $region37: #{pamlp_forward.1} parent=1 // pred_fallthru
      _
    %v59 = vld [vmem:[%s0] sm:$0xff]
    %v60 = vld [vmem:[%s0 + $0x8] sm:$0xff]
    %v61 = vld [vmem:[%s0 + $0x10] sm:$0xff]
    %v62 = vld [vmem:[%s0 + $0x18] sm:$0xff]
    %v63 = vld [vmem:[%s0 + $0x20] sm:$0xff]
    %v64 = vld [vmem:[%s0 + $0x28] sm:$0xff]
    %v65 = vld [vmem:[%s0 + $0x30] sm:$0xff]
    %v66 = vld [vmem:[%s0 + $0x38] sm:$0xff]
    %v67 = vpack.c.bf16 %v60, %v59
    %v68 = vpack.c.bf16 %v62, %v61
    %v69 = vpack.c.bf16 %v64, %v63
    %v70 = vpack.c.bf16 %v66, %v65
    %v71 = vld [vmem:[#allocation2] sm:$0xff]
    %v72 = vld [vmem:[#allocation2 + $0x8] sm:$0xff]
    %v73 = vld [vmem:[#allocation2 + $0x10] sm:$0xff]
    %v74 = vld [vmem:[#allocation2 + $0x18] sm:$0xff]
    %v75 = vld [vmem:[#allocation2 + $0x20] sm:$0xff]
    %v76 = vld [vmem:[#allocation2 + $0x28] sm:$0xff]
    %v77 = vld [vmem:[#allocation2 + $0x30] sm:$0xff]
    %v78 = vld [vmem:[#allocation2 + $0x38] sm:$0xff]
    %v79 = vld [vmem:[%s2] sm:$0x3]
    %v81 = vperm.slane %v79, 0
    %v82 = vperm.slane %v79, 1
    %v93 = vunpack.c.l.b16 %v71
    %v94 = vunpack.c.h.b16 %v71
    %v95 = vunpack.c.l.b16 %v72
    %v96 = vunpack.c.h.b16 %v72
    %v97 = vunpack.c.l.b16 %v73
    %v98 = vunpack.c.h.b16 %v73
    %v99 = vunpack.c.l.b16 %v74
    %v100 = vunpack.c.h.b16 %v74
    %v101 = vunpack.c.l.b16 %v75
    %v102 = vunpack.c.h.b16 %v75
    %v103 = vunpack.c.l.b16 %v76
    %v104 = vunpack.c.h.b16 %v76
    %v105 = vunpack.c.l.b16 %v77
    %v106 = vunpack.c.h.b16 %v77
    %v107 = vunpack.c.l.b16 %v78
    %v108 = vunpack.c.h.b16 %v78
    %v109 = vpack.c.b16 %v95, %v93
    %v110 = vpack.c.b16 %v96, %v94
    %v111 = vpack.c.b16 %v99, %v97
    %v112 = vpack.c.b16 %v100, %v98
    %v113 = vpack.c.b16 %v103, %v101
    %v114 = vpack.c.b16 %v104, %v102
    %v115 = vpack.c.b16 %v107, %v105
    %v116 = vpack.c.b16 %v108, %v106
    %vm125 = vcmask 523264
    %v127 = vsel %vm125, %v67, 0
    %v130 = vsel %vm125, %v68, 0
    %v133 = vsel %vm125, %v69, 0
    %v136 = vsel %vm125, %v70, 0
    %138 = vmatpush.bf16.msra.mxu0 0
    %139 = vmatpush.bf16.msra.mxu0 0
    %140 = vmatpush.bf16.msra.mxu0 0
    %141 = vmatpush.bf16.msra.mxu0 0
    %142 = vmatpush.bf16.msra.mxu0 %v115
    %143 = vmatpush.bf16.msra.mxu0 %v113
    %144 = vmatpush.bf16.msra.mxu0 %v111
    %145 = vmatpush.bf16.msra.mxu0 %v109
    %146 = vmatmul.bf16.gmra.mxu0 %v127
    %v147 = vpop.f32.mrf.mxu0
    %v148 = vadd.f32 %v81, %v147
    %v149 = vpop.f32.mrf.mxu0
    %v150 = vadd.f32 %v81, %v149
    %151 = vmatmul.bf16.gmra.mxu0 %v130
    %v152 = vpop.f32.mrf.mxu0
    %v153 = vadd.f32 %v81, %v152
    %v154 = vpop.f32.mrf.mxu0
    %v155 = vadd.f32 %v81, %v154
    %156 = vmatmul.bf16.gmra.mxu0 %v133
    %v157 = vpop.f32.mrf.mxu0
    %v158 = vadd.f32 %v81, %v157
    %v159 = vpop.f32.mrf.mxu0
    %v160 = vadd.f32 %v81, %v159
    %161 = vmatmul.bf16.gmra.mxu0 %v136
    %v162 = vpop.f32.mrf.mxu0
    %v163 = vadd.f32 %v81, %v162
    %v164 = vpop.f32.mrf.mxu0
    %v165 = vadd.f32 %v81, %v164
    %166 = vdwg.mxu0
    %167 = vmatpush.bf16.msra.mxu0 0
    %168 = vmatpush.bf16.msra.mxu0 0
    %169 = vmatpush.bf16.msra.mxu0 0
    %170 = vmatpush.bf16.msra.mxu0 0
    %171 = vmatpush.bf16.msra.mxu0 %v116
    %172 = vmatpush.bf16.msra.mxu0 %v114
    %173 = vmatpush.bf16.msra.mxu0 %v112
    %174 = vmatpush.bf16.msra.mxu0 %v110
    %175 = vmatmul.bf16.gmra.mxu0 %v127
    %v176 = vpop.f32.mrf.mxu0
    %v177 = vadd.f32 %v82, %v176
    %v178 = vpop.f32.mrf.mxu0
    %v179 = vadd.f32 %v82, %v178
    %180 = vmatmul.bf16.gmra.mxu0 %v130
    %v181 = vpop.f32.mrf.mxu0
    %v182 = vadd.f32 %v82, %v181
    %v183 = vpop.f32.mrf.mxu0
    %v184 = vadd.f32 %v82, %v183
    %185 = vmatmul.bf16.gmra.mxu0 %v133
    %v186 = vpop.f32.mrf.mxu0
    %v187 = vadd.f32 %v82, %v186
    %v188 = vpop.f32.mrf.mxu0
    %v189 = vadd.f32 %v82, %v188
    %190 = vmatmul.bf16.gmra.mxu0 %v136
    %v191 = vpop.f32.mrf.mxu0
    %v192 = vadd.f32 %v82, %v191
    %v193 = vpop.f32.mrf.mxu0
    %v194 = vadd.f32 %v82, %v193
    %195 = vdwg.mxu0
    %v196 = vmax.f32 %v148, 0.0
    %v197 = vmax.f32 %v177, 0.0
    %v198 = vmax.f32 %v150, 0.0
    %v199 = vmax.f32 %v179, 0.0
    %v200 = vmax.f32 %v153, 0.0
    %v201 = vmax.f32 %v182, 0.0
    %v202 = vmax.f32 %v155, 0.0
    %v203 = vmax.f32 %v184, 0.0
    %v204 = vmax.f32 %v158, 0.0
    %v205 = vmax.f32 %v187, 0.0
    %v206 = vmax.f32 %v160, 0.0
    %v207 = vmax.f32 %v189, 0.0
    %v208 = vmax.f32 %v163, 0.0
    %v209 = vmax.f32 %v192, 0.0
    %v210 = vmax.f32 %v165, 0.0
    %v211 = vmax.f32 %v194, 0.0
    %v212 = vpack.c.bf16 %v198, %v196
    %v213 = vpack.c.bf16 %v199, %v197
    %v214 = vpack.c.bf16 %v202, %v200
    %v215 = vpack.c.bf16 %v203, %v201
    %v216 = vpack.c.bf16 %v206, %v204
    %v217 = vpack.c.bf16 %v207, %v205
    %v218 = vpack.c.bf16 %v210, %v208
    %v219 = vpack.c.bf16 %v211, %v209
    %v220 = vld [vmem:[#allocation4] sm:$0xff]
    %v221 = vld [vmem:[#allocation4 + $0x8] sm:$0xff]
    %v222 = vld [vmem:[#allocation4 + $0x10] sm:$0xff]
    %v223 = vld [vmem:[#allocation4 + $0x18] sm:$0xff]
    %v224 = vld [vmem:[#allocation4 + $0x20] sm:$0xff]
    %v225 = vld [vmem:[#allocation4 + $0x28] sm:$0xff]
    %v226 = vld [vmem:[#allocation4 + $0x30] sm:$0xff]
    %v227 = vld [vmem:[#allocation4 + $0x38] sm:$0xff]
    %v228 = vld [vmem:[#allocation4 + $0x40] sm:$0xff]
    %v229 = vld [vmem:[#allocation4 + $0x48] sm:$0xff]
    %v230 = vld [vmem:[#allocation4 + $0x50] sm:$0xff]
    %v231 = vld [vmem:[#allocation4 + $0x58] sm:$0xff]
    %v232 = vld [vmem:[#allocation4 + $0x60] sm:$0xff]
    %v233 = vld [vmem:[#allocation4 + $0x68] sm:$0xff]
    %v234 = vld [vmem:[#allocation4 + $0x70] sm:$0xff]
    %v235 = vld [vmem:[#allocation4 + $0x78] sm:$0xff]
    %v236 = vld [vmem:[#allocation4 + $0x80] sm:$0xff]
    %v237 = vld [vmem:[#allocation4 + $0x88] sm:$0xff]
    %v238 = vld [vmem:[#allocation4 + $0x90] sm:$0xff]
    %v239 = vld [vmem:[#allocation4 + $0x98] sm:$0xff]
    %v240 = vld [vmem:[#allocation4 + $0xa0] sm:$0xff]
    %v241 = vld [vmem:[#allocation4 + $0xa8] sm:$0xff]
    %v242 = vld [vmem:[#allocation4 + $0xb0] sm:$0xff]
    %v243 = vld [vmem:[#allocation4 + $0xb8] sm:$0xff]
    %v244 = vld [vmem:[#allocation4 + $0xc0] sm:$0xff]
    %v245 = vld [vmem:[#allocation4 + $0xc8] sm:$0xff]
    %v246 = vld [vmem:[#allocation4 + $0xd0] sm:$0xff]
    %v247 = vld [vmem:[#allocation4 + $0xd8] sm:$0xff]
    %v248 = vld [vmem:[#allocation4 + $0xe0] sm:$0xff]
    %v249 = vld [vmem:[#allocation4 + $0xe8] sm:$0xff]
    %v250 = vld [vmem:[#allocation4 + $0xf0] sm:$0xff]
    %v251 = vld [vmem:[#allocation4 + $0xf8] sm:$0xff]
    %v252 = vld [vmem:[%s4] sm:$0x3]
    %v254 = vperm.slane %v252, 0
    %v255 = vperm.slane %v252, 1
    %v290 = vunpack.c.l.b16 %v220
    %v291 = vunpack.c.h.b16 %v220
    %v292 = vunpack.c.l.b16 %v221
    %v293 = vunpack.c.h.b16 %v221
    %v294 = vunpack.c.l.b16 %v222
    %v295 = vunpack.c.h.b16 %v222
    %v296 = vunpack.c.l.b16 %v223
    %v297 = vunpack.c.h.b16 %v223
    %v298 = vunpack.c.l.b16 %v224
    %v299 = vunpack.c.h.b16 %v224
    %v300 = vunpack.c.l.b16 %v225
    %v301 = vunpack.c.h.b16 %v225
    %v302 = vunpack.c.l.b16 %v226
    %v303 = vunpack.c.h.b16 %v226
    %v304 = vunpack.c.l.b16 %v227
    %v305 = vunpack.c.h.b16 %v227
    %v306 = vunpack.c.l.b16 %v228
    %v307 = vunpack.c.h.b16 %v228
    %v308 = vunpack.c.l.b16 %v229
    %v309 = vunpack.c.h.b16 %v229
    %v310 = vunpack.c.l.b16 %v230
    %v311 = vunpack.c.h.b16 %v230
    %v312 = vunpack.c.l.b16 %v231
    %v313 = vunpack.c.h.b16 %v231
    %v314 = vunpack.c.l.b16 %v232
    %v315 = vunpack.c.h.b16 %v232
    %v316 = vunpack.c.l.b16 %v233
    %v317 = vunpack.c.h.b16 %v233
    %v318 = vunpack.c.l.b16 %v234
    %v319 = vunpack.c.h.b16 %v234
    %v320 = vunpack.c.l.b16 %v235
    %v321 = vunpack.c.h.b16 %v235
    %v322 = vunpack.c.l.b16 %v236
    %v323 = vunpack.c.h.b16 %v236
    %v324 = vunpack.c.l.b16 %v237
    %v325 = vunpack.c.h.b16 %v237
    %v326 = vunpack.c.l.b16 %v238
    %v327 = vunpack.c.h.b16 %v238
    %v328 = vunpack.c.l.b16 %v239
    %v329 = vunpack.c.h.b16 %v239
    %v330 = vunpack.c.l.b16 %v240
    %v331 = vunpack.c.h.b16 %v240
    %v332 = vunpack.c.l.b16 %v241
    %v333 = vunpack.c.h.b16 %v241
    %v334 = vunpack.c.l.b16 %v242
    %v335 = vunpack.c.h.b16 %v242
    %v336 = vunpack.c.l.b16 %v243
    %v337 = vunpack.c.h.b16 %v243
    %v338 = vunpack.c.l.b16 %v244
    %v339 = vunpack.c.h.b16 %v244
    %v340 = vunpack.c.l.b16 %v245
    %v341 = vunpack.c.h.b16 %v245
    %v342 = vunpack.c.l.b16 %v246
    %v343 = vunpack.c.h.b16 %v246
    %v344 = vunpack.c.l.b16 %v247
    %v345 = vunpack.c.h.b16 %v247
    %v346 = vunpack.c.l.b16 %v248
    %v347 = vunpack.c.h.b16 %v248
    %v348 = vunpack.c.l.b16 %v249
    %v349 = vunpack.c.h.b16 %v249
    %v350 = vunpack.c.l.b16 %v250
    %v351 = vunpack.c.h.b16 %v250
    %v352 = vunpack.c.l.b16 %v251
    %v353 = vunpack.c.h.b16 %v251
    %v354 = vpack.c.b16 %v292, %v290
    %v355 = vpack.c.b16 %v293, %v291
    %v356 = vpack.c.b16 %v296, %v294
    %v357 = vpack.c.b16 %v297, %v295
    %v358 = vpack.c.b16 %v300, %v298
    %v359 = vpack.c.b16 %v301, %v299
    %v360 = vpack.c.b16 %v304, %v302
    %v361 = vpack.c.b16 %v305, %v303
    %v362 = vpack.c.b16 %v308, %v306
    %v363 = vpack.c.b16 %v309, %v307
    %v364 = vpack.c.b16 %v312, %v310
    %v365 = vpack.c.b16 %v313, %v311
    %v366 = vpack.c.b16 %v316, %v314
    %v367 = vpack.c.b16 %v317, %v315
    %v368 = vpack.c.b16 %v320, %v318
    %v369 = vpack.c.b16 %v321, %v319
    %v370 = vpack.c.b16 %v324, %v322
    %v371 = vpack.c.b16 %v325, %v323
    %v372 = vpack.c.b16 %v328, %v326
    %v373 = vpack.c.b16 %v329, %v327
    %v374 = vpack.c.b16 %v332, %v330
    %v375 = vpack.c.b16 %v333, %v331
    %v376 = vpack.c.b16 %v336, %v334
    %v377 = vpack.c.b16 %v337, %v335
    %v378 = vpack.c.b16 %v340, %v338
    %v379 = vpack.c.b16 %v341, %v339
    %v380 = vpack.c.b16 %v344, %v342
    %v381 = vpack.c.b16 %v345, %v343
    %v382 = vpack.c.b16 %v348, %v346
    %v383 = vpack.c.b16 %v349, %v347
    %v384 = vpack.c.b16 %v352, %v350
    %v385 = vpack.c.b16 %v353, %v351
    %418 = vmatpush.bf16.msra.mxu0 %v368
    %419 = vmatpush.bf16.msra.mxu0 %v366
    %420 = vmatpush.bf16.msra.mxu0 %v364
    %421 = vmatpush.bf16.msra.mxu0 %v362
    %422 = vmatpush.bf16.msra.mxu0 %v360
    %423 = vmatpush.bf16.msra.mxu0 %v358
    %424 = vmatpush.bf16.msra.mxu0 %v356
    %425 = vmatpush.bf16.msra.mxu0 %v354
    %426 = vmatmul.bf16.gmra.mxu0 %v212
    %v427 = vpop.f32.mrf.mxu0
    %v428 = vadd.f32 %v254, %v427
    %v429 = vpop.f32.mrf.mxu0
    %v430 = vadd.f32 %v254, %v429
    %431 = vmatmul.bf16.gmra.mxu0 %v214
    %v432 = vpop.f32.mrf.mxu0
    %v433 = vadd.f32 %v254, %v432
    %v434 = vpop.f32.mrf.mxu0
    %v435 = vadd.f32 %v254, %v434
    %436 = vmatmul.bf16.gmra.mxu0 %v216
    %v437 = vpop.f32.mrf.mxu0
    %v438 = vadd.f32 %v254, %v437
    %v439 = vpop.f32.mrf.mxu0
    %v440 = vadd.f32 %v254, %v439
    %441 = vmatmul.bf16.gmra.mxu0 %v218
    %v442 = vpop.f32.mrf.mxu0
    %v443 = vadd.f32 %v254, %v442
    %v444 = vpop.f32.mrf.mxu0
    %v445 = vadd.f32 %v254, %v444
    %446 = vdwg.mxu0
    %447 = vmatpush.bf16.msra.mxu0 %v384
    %448 = vmatpush.bf16.msra.mxu0 %v382
    %449 = vmatpush.bf16.msra.mxu0 %v380
    %450 = vmatpush.bf16.msra.mxu0 %v378
    %451 = vmatpush.bf16.msra.mxu0 %v376
    %452 = vmatpush.bf16.msra.mxu0 %v374
    %453 = vmatpush.bf16.msra.mxu0 %v372
    %454 = vmatpush.bf16.msra.mxu0 %v370
    %455 = vmatmul.bf16.gmra.mxu0 %v213
    %v456 = vpop.f32.mrf.mxu0
    %v457 = vadd.f32 %v428, %v456
    %v458 = vpop.f32.mrf.mxu0
    %v459 = vadd.f32 %v430, %v458
    %460 = vmatmul.bf16.gmra.mxu0 %v215
    %v461 = vpop.f32.mrf.mxu0
    %v462 = vadd.f32 %v433, %v461
    %v463 = vpop.f32.mrf.mxu0
    %v464 = vadd.f32 %v435, %v463
    %465 = vmatmul.bf16.gmra.mxu0 %v217
    %v466 = vpop.f32.mrf.mxu0
    %v467 = vadd.f32 %v438, %v466
    %v468 = vpop.f32.mrf.mxu0
    %v469 = vadd.f32 %v440, %v468
    %470 = vmatmul.bf16.gmra.mxu0 %v219
    %v471 = vpop.f32.mrf.mxu0
    %v472 = vadd.f32 %v443, %v471
    %v473 = vpop.f32.mrf.mxu0
    %v474 = vadd.f32 %v445, %v473
    %475 = vdwg.mxu0
    %476 = vmatpush.bf16.msra.mxu0 %v369
    %477 = vmatpush.bf16.msra.mxu0 %v367
    %478 = vmatpush.bf16.msra.mxu0 %v365
    %479 = vmatpush.bf16.msra.mxu0 %v363
    %480 = vmatpush.bf16.msra.mxu0 %v361
    %481 = vmatpush.bf16.msra.mxu0 %v359
    %482 = vmatpush.bf16.msra.mxu0 %v357
    %483 = vmatpush.bf16.msra.mxu0 %v355
    %484 = vmatmul.bf16.gmra.mxu0 %v212
    %v485 = vpop.f32.mrf.mxu0
    %v486 = vadd.f32 %v255, %v485
    %v487 = vpop.f32.mrf.mxu0
    %v488 = vadd.f32 %v255, %v487
    %489 = vmatmul.bf16.gmra.mxu0 %v214
    %v490 = vpop.f32.mrf.mxu0
    %v491 = vadd.f32 %v255, %v490
    %v492 = vpop.f32.mrf.mxu0
    %v493 = vadd.f32 %v255, %v492
    %494 = vmatmul.bf16.gmra.mxu0 %v216
    %v495 = vpop.f32.mrf.mxu0
    %v496 = vadd.f32 %v255, %v495
    %v497 = vpop.f32.mrf.mxu0
    %v498 = vadd.f32 %v255, %v497
    %499 = vmatmul.bf16.gmra.mxu0 %v218
    %v500 = vpop.f32.mrf.mxu0
    %v501 = vadd.f32 %v255, %v500
    %v502 = vpop.f32.mrf.mxu0
    %v503 = vadd.f32 %v255, %v502
    %504 = vdwg.mxu0
    %505 = vmatpush.bf16.msra.mxu0 %v385
    %506 = vmatpush.bf16.msra.mxu0 %v383
    %507 = vmatpush.bf16.msra.mxu0 %v381
    %508 = vmatpush.bf16.msra.mxu0 %v379
    %509 = vmatpush.bf16.msra.mxu0 %v377
    %510 = vmatpush.bf16.msra.mxu0 %v375
    %511 = vmatpush.bf16.msra.mxu0 %v373
    %512 = vmatpush.bf16.msra.mxu0 %v371
    %513 = vmatmul.bf16.gmra.mxu0 %v213
    %v514 = vpop.f32.mrf.mxu0
    %v515 = vadd.f32 %v486, %v514
    %v516 = vpop.f32.mrf.mxu0
    %v517 = vadd.f32 %v488, %v516
    %518 = vmatmul.bf16.gmra.mxu0 %v215
    %v519 = vpop.f32.mrf.mxu0
    %v520 = vadd.f32 %v491, %v519
    %v521 = vpop.f32.mrf.mxu0
    %v522 = vadd.f32 %v493, %v521
    %523 = vmatmul.bf16.gmra.mxu0 %v217
    %v524 = vpop.f32.mrf.mxu0
    %v525 = vadd.f32 %v496, %v524
    %v526 = vpop.f32.mrf.mxu0
    %v527 = vadd.f32 %v498, %v526
    %528 = vmatmul.bf16.gmra.mxu0 %v219
    %v529 = vpop.f32.mrf.mxu0
    %v530 = vadd.f32 %v501, %v529
    %v531 = vpop.f32.mrf.mxu0
    %v532 = vadd.f32 %v503, %v531
    %533 = vdwg.mxu0
    %v534 = vmax.f32 %v457, 0.0
    %v535 = vmax.f32 %v515, 0.0
    %v536 = vmax.f32 %v459, 0.0
    %v537 = vmax.f32 %v517, 0.0
    %v538 = vmax.f32 %v462, 0.0
    %v539 = vmax.f32 %v520, 0.0
    %v540 = vmax.f32 %v464, 0.0
    %v541 = vmax.f32 %v522, 0.0
    %v542 = vmax.f32 %v467, 0.0
    %v543 = vmax.f32 %v525, 0.0
    %v544 = vmax.f32 %v469, 0.0
    %v545 = vmax.f32 %v527, 0.0
    %v546 = vmax.f32 %v472, 0.0
    %v547 = vmax.f32 %v530, 0.0
    %v548 = vmax.f32 %v474, 0.0
    %v549 = vmax.f32 %v532, 0.0
    %v550 = vpack.c.bf16 %v536, %v534
    %v551 = vpack.c.bf16 %v537, %v535
    %v552 = vpack.c.bf16 %v540, %v538
    %v553 = vpack.c.bf16 %v541, %v539
    %v554 = vpack.c.bf16 %v544, %v542
    %v555 = vpack.c.bf16 %v545, %v543
    %v556 = vpack.c.bf16 %v548, %v546
    %v557 = vpack.c.bf16 %v549, %v547
    %v558 = vld [vmem:[%s5] sm:$0xf]
    %v559 = vld [vmem:[%s5 + $0x4] sm:$0xf]
    %v560 = vld [vmem:[%s5 + $0x8] sm:$0xf]
    %v561 = vld [vmem:[%s5 + $0xc] sm:$0xf]
    %v562 = vld [vmem:[%s5 + $0x10] sm:$0xf]
    %v563 = vld [vmem:[%s5 + $0x14] sm:$0xf]
    %v564 = vld [vmem:[%s5 + $0x18] sm:$0xf]
    %v565 = vld [vmem:[%s5 + $0x1c] sm:$0xf]
    %v566 = vld [vmem:[%s5 + $0x20] sm:$0xf]
    %v567 = vld [vmem:[%s5 + $0x24] sm:$0xf]
    %v568 = vld [vmem:[%s5 + $0x28] sm:$0xf]
    %v569 = vld [vmem:[%s5 + $0x2c] sm:$0xf]
    %v570 = vld [vmem:[%s5 + $0x30] sm:$0xf]
    %v571 = vld [vmem:[%s5 + $0x34] sm:$0xf]
    %v572 = vld [vmem:[%s5 + $0x38] sm:$0xf]
    %v573 = vld [vmem:[%s5 + $0x3c] sm:$0xf]
    %v574 = vld [vmem:[%s5 + $0x40] sm:$0xf]
    %v575 = vld [vmem:[%s5 + $0x44] sm:$0xf]
    %v576 = vld [vmem:[%s5 + $0x48] sm:$0xf]
    %v577 = vld [vmem:[%s5 + $0x4c] sm:$0xf]
    %v578 = vld [vmem:[%s5 + $0x50] sm:$0xf]
    %v579 = vld [vmem:[%s5 + $0x54] sm:$0xf]
    %v580 = vld [vmem:[%s5 + $0x58] sm:$0xf]
    %v581 = vld [vmem:[%s5 + $0x5c] sm:$0xf]
    %v582 = vld [vmem:[%s5 + $0x60] sm:$0xf]
    %v583 = vld [vmem:[%s5 + $0x64] sm:$0xf]
    %v584 = vld [vmem:[%s5 + $0x68] sm:$0xf]
    %v585 = vld [vmem:[%s5 + $0x6c] sm:$0xf]
    %v586 = vld [vmem:[%s5 + $0x70] sm:$0xf]
    %v587 = vld [vmem:[%s5 + $0x74] sm:$0xf]
    %v588 = vld [vmem:[%s5 + $0x78] sm:$0xf]
    %v589 = vld [vmem:[%s5 + $0x7c] sm:$0xf]
    %v590 = vld [vmem:[%s6] sm:$0x1]
    %v592 = vperm.slane %v590, 0
    %v626 = vunpack.c.l.b16 %v558
    %v627 = vunpack.c.l.b16 %v559
    %v628 = vunpack.c.l.b16 %v560
    %v629 = vunpack.c.l.b16 %v561
    %v630 = vunpack.c.l.b16 %v562
    %v631 = vunpack.c.l.b16 %v563
    %v632 = vunpack.c.l.b16 %v564
    %v633 = vunpack.c.l.b16 %v565
    %v634 = vunpack.c.l.b16 %v566
    %v635 = vunpack.c.l.b16 %v567
    %v636 = vunpack.c.l.b16 %v568
    %v637 = vunpack.c.l.b16 %v569
    %v638 = vunpack.c.l.b16 %v570
    %v639 = vunpack.c.l.b16 %v571
    %v640 = vunpack.c.l.b16 %v572
    %v641 = vunpack.c.l.b16 %v573
    %v642 = vunpack.c.l.b16 %v574
    %v643 = vunpack.c.l.b16 %v575
    %v644 = vunpack.c.l.b16 %v576
    %v645 = vunpack.c.l.b16 %v577
    %v646 = vunpack.c.l.b16 %v578
    %v647 = vunpack.c.l.b16 %v579
    %v648 = vunpack.c.l.b16 %v580
    %v649 = vunpack.c.l.b16 %v581
    %v650 = vunpack.c.l.b16 %v582
    %v651 = vunpack.c.l.b16 %v583
    %v652 = vunpack.c.l.b16 %v584
    %v653 = vunpack.c.l.b16 %v585
    %v654 = vunpack.c.l.b16 %v586
    %v655 = vunpack.c.l.b16 %v587
    %v656 = vunpack.c.l.b16 %v588
    %v657 = vunpack.c.l.b16 %v589
    %v658 = vpack.c.b16 %v627, %v626
    %v659 = vpack.c.b16 %v629, %v628
    %v660 = vpack.c.b16 %v631, %v630
    %v661 = vpack.c.b16 %v633, %v632
    %v662 = vpack.c.b16 %v635, %v634
    %v663 = vpack.c.b16 %v637, %v636
    %v664 = vpack.c.b16 %v639, %v638
    %v665 = vpack.c.b16 %v641, %v640
    %v666 = vpack.c.b16 %v643, %v642
    %v667 = vpack.c.b16 %v645, %v644
    %v668 = vpack.c.b16 %v647, %v646
    %v669 = vpack.c.b16 %v649, %v648
    %v670 = vpack.c.b16 %v651, %v650
    %v671 = vpack.c.b16 %v653, %v652
    %v672 = vpack.c.b16 %v655, %v654
    %v673 = vpack.c.b16 %v657, %v656
    %690 = vmatpush.bf16.msra.mxu0 %v665
    %691 = vmatpush.bf16.msra.mxu0 %v664
    %692 = vmatpush.bf16.msra.mxu0 %v663
    %693 = vmatpush.bf16.msra.mxu0 %v662
    %694 = vmatpush.bf16.msra.mxu0 %v661
    %695 = vmatpush.bf16.msra.mxu0 %v660
    %696 = vmatpush.bf16.msra.mxu0 %v659
    %697 = vmatpush.bf16.msra.mxu0 %v658
    %698 = vmatmul.bf16.gmra.mxu0 %v550
    %v699 = vpop.f32.mrf.mxu0
    %v700 = vadd.f32 %v592, %v699
    %v701 = vpop.f32.mrf.mxu0
    %v702 = vadd.f32 %v592, %v701
    %703 = vmatmul.bf16.gmra.mxu0 %v552
    %v704 = vpop.f32.mrf.mxu0
    %v705 = vadd.f32 %v592, %v704
    %v706 = vpop.f32.mrf.mxu0
    %v707 = vadd.f32 %v592, %v706
    %708 = vmatmul.bf16.gmra.mxu0 %v554
    %v709 = vpop.f32.mrf.mxu0
    %v710 = vadd.f32 %v592, %v709
    %v711 = vpop.f32.mrf.mxu0
    %v712 = vadd.f32 %v592, %v711
    %713 = vmatmul.bf16.gmra.mxu0 %v556
    %v714 = vpop.f32.mrf.mxu0
    %v715 = vadd.f32 %v592, %v714
    %v716 = vpop.f32.mrf.mxu0
    %v717 = vadd.f32 %v592, %v716
    %718 = vdwg.mxu0
    %719 = vmatpush.bf16.msra.mxu0 %v673
    %720 = vmatpush.bf16.msra.mxu0 %v672
    %721 = vmatpush.bf16.msra.mxu0 %v671
    %722 = vmatpush.bf16.msra.mxu0 %v670
    %723 = vmatpush.bf16.msra.mxu0 %v669
    %724 = vmatpush.bf16.msra.mxu0 %v668
    %725 = vmatpush.bf16.msra.mxu0 %v667
    %726 = vmatpush.bf16.msra.mxu0 %v666
    %727 = vmatmul.bf16.gmra.mxu0 %v551
    %v728 = vpop.f32.mrf.mxu0
    %v729 = vadd.f32 %v700, %v728
    %v730 = vpop.f32.mrf.mxu0
    %v731 = vadd.f32 %v702, %v730
    %732 = vmatmul.bf16.gmra.mxu0 %v553
    %v733 = vpop.f32.mrf.mxu0
    %v734 = vadd.f32 %v705, %v733
    %v735 = vpop.f32.mrf.mxu0
    %v736 = vadd.f32 %v707, %v735
    %737 = vmatmul.bf16.gmra.mxu0 %v555
    %v738 = vpop.f32.mrf.mxu0
    %v739 = vadd.f32 %v710, %v738
    %v740 = vpop.f32.mrf.mxu0
    %v741 = vadd.f32 %v712, %v740
    %742 = vmatmul.bf16.gmra.mxu0 %v557
    %v743 = vpop.f32.mrf.mxu0
    %v744 = vadd.f32 %v715, %v743
    %v745 = vpop.f32.mrf.mxu0
    %v746 = vadd.f32 %v717, %v745
    %747 = vdwg.mxu0
    %v748 = vxor.u32 %v729, 2147483648
    %v749 = vxor.u32 %v731, 2147483648
    %v750 = vxor.u32 %v734, 2147483648
    %v751 = vxor.u32 %v736, 2147483648
    %v752 = vxor.u32 %v739, 2147483648
    %v753 = vxor.u32 %v741, 2147483648
    %v754 = vxor.u32 %v744, 2147483648
    %v755 = vxor.u32 %v746, 2147483648
    %v756 = vmul.f32 %v748, 1.442695
    %v757 = vpow.pop %v756
    %v758 = vmul.f32 %v749, 1.442695
    %v759 = vpow.pop %v758
    %v760 = vmul.f32 %v750, 1.442695
    %v761 = vpow.pop %v760
    %v762 = vmul.f32 %v751, 1.442695
    %v763 = vpow.pop %v762
    %v764 = vmul.f32 %v752, 1.442695
    %v765 = vpow.pop %v764
    %v766 = vmul.f32 %v753, 1.442695
    %v767 = vpow.pop %v766
    %v768 = vmul.f32 %v754, 1.442695
    %v769 = vpow.pop %v768
    %v770 = vmul.f32 %v755, 1.442695
    %v771 = vpow.pop %v770
    %v772 = vadd.f32 %v757, 1.0
    %v773 = vadd.f32 %v759, 1.0
    %v774 = vadd.f32 %v761, 1.0
    %v775 = vadd.f32 %v763, 1.0
    %v776 = vadd.f32 %v765, 1.0
    %v777 = vadd.f32 %v767, 1.0
    %v778 = vadd.f32 %v769, 1.0
    %v779 = vadd.f32 %v771, 1.0
    %v780 = vrcp.pop %v772
    %v781 = vmul.f32 %v772, %v780
    %v782 = vsub.f32 1.0, %v781
    %v783 = vmul.f32 %v780, %v782
    %v784 = vadd.f32 %v780, %v783
    %vm785 = vweird.f32 %v772
    %vm786 = vweird.f32 %v780
    %vm787 = vmor %vm785, %vm786
    %v788 = vsel %vm787, %v780, %v784
    %v789 = vand.u32 2147483647, %v772
    %vm790 = vcmp.eq.f32.partialorder %v789, 8.507059e+37
    %v791 = vand.u32 %v772, 2147483648
    %v792 = vor.u32 1.1754944e-38, %v791
    %v793 = vsel %vm790, %v792, %v788
    %v794 = vmul.f32 1.0, %v793
    %v795 = vrcp.pop %v773
    %v796 = vmul.f32 %v773, %v795
    %v797 = vsub.f32 1.0, %v796
    %v798 = vmul.f32 %v795, %v797
    %v799 = vadd.f32 %v795, %v798
    %vm800 = vweird.f32 %v773
    %vm801 = vweird.f32 %v795
    %vm802 = vmor %vm800, %vm801
    %v803 = vsel %vm802, %v795, %v799
    %v804 = vand.u32 2147483647, %v773
    %vm805 = vcmp.eq.f32.partialorder %v804, 8.507059e+37
    %v806 = vand.u32 %v773, 2147483648
    %v807 = vor.u32 1.1754944e-38, %v806
    %v808 = vsel %vm805, %v807, %v803
    %v809 = vmul.f32 1.0, %v808
    %v810 = vrcp.pop %v774
    %v811 = vmul.f32 %v774, %v810
    %v812 = vsub.f32 1.0, %v811
    %v813 = vmul.f32 %v810, %v812
    %v814 = vadd.f32 %v810, %v813
    %vm815 = vweird.f32 %v774
    %vm816 = vweird.f32 %v810
    %vm817 = vmor %vm815, %vm816
    %v818 = vsel %vm817, %v810, %v814
    %v819 = vand.u32 2147483647, %v774
    %vm820 = vcmp.eq.f32.partialorder %v819, 8.507059e+37
    %v821 = vand.u32 %v774, 2147483648
    %v822 = vor.u32 1.1754944e-38, %v821
    %v823 = vsel %vm820, %v822, %v818
    %v824 = vmul.f32 1.0, %v823
    %v825 = vrcp.pop %v775
    %v826 = vmul.f32 %v775, %v825
    %v827 = vsub.f32 1.0, %v826
    %v828 = vmul.f32 %v825, %v827
    %v829 = vadd.f32 %v825, %v828
    %vm830 = vweird.f32 %v775
    %vm831 = vweird.f32 %v825
    %vm832 = vmor %vm830, %vm831
    %v833 = vsel %vm832, %v825, %v829
    %v834 = vand.u32 2147483647, %v775
    %vm835 = vcmp.eq.f32.partialorder %v834, 8.507059e+37
    %v836 = vand.u32 %v775, 2147483648
    %v837 = vor.u32 1.1754944e-38, %v836
    %v838 = vsel %vm835, %v837, %v833
    %v839 = vmul.f32 1.0, %v838
    %v840 = vrcp.pop %v776
    %v841 = vmul.f32 %v776, %v840
    %v842 = vsub.f32 1.0, %v841
    %v843 = vmul.f32 %v840, %v842
    %v844 = vadd.f32 %v840, %v843
    %vm845 = vweird.f32 %v776
    %vm846 = vweird.f32 %v840
    %vm847 = vmor %vm845, %vm846
    %v848 = vsel %vm847, %v840, %v844
    %v849 = vand.u32 2147483647, %v776
    %vm850 = vcmp.eq.f32.partialorder %v849, 8.507059e+37
    %v851 = vand.u32 %v776, 2147483648
    %v852 = vor.u32 1.1754944e-38, %v851
    %v853 = vsel %vm850, %v852, %v848
    %v854 = vmul.f32 1.0, %v853
    %v855 = vrcp.pop %v777
    %v856 = vmul.f32 %v777, %v855
    %v857 = vsub.f32 1.0, %v856
    %v858 = vmul.f32 %v855, %v857
    %v859 = vadd.f32 %v855, %v858
    %vm860 = vweird.f32 %v777
    %vm861 = vweird.f32 %v855
    %vm862 = vmor %vm860, %vm861
    %v863 = vsel %vm862, %v855, %v859
    %v864 = vand.u32 2147483647, %v777
    %vm865 = vcmp.eq.f32.partialorder %v864, 8.507059e+37
    %v866 = vand.u32 %v777, 2147483648
    %v867 = vor.u32 1.1754944e-38, %v866
    %v868 = vsel %vm865, %v867, %v863
    %v869 = vmul.f32 1.0, %v868
    %v870 = vrcp.pop %v778
    %v871 = vmul.f32 %v778, %v870
    %v872 = vsub.f32 1.0, %v871
    %v873 = vmul.f32 %v870, %v872
    %v874 = vadd.f32 %v870, %v873
    %vm875 = vweird.f32 %v778
    %vm876 = vweird.f32 %v870
    %vm877 = vmor %vm875, %vm876
    %v878 = vsel %vm877, %v870, %v874
    %v879 = vand.u32 2147483647, %v778
    %vm880 = vcmp.eq.f32.partialorder %v879, 8.507059e+37
    %v881 = vand.u32 %v778, 2147483648
    %v882 = vor.u32 1.1754944e-38, %v881
    %v883 = vsel %vm880, %v882, %v878
    %v884 = vmul.f32 1.0, %v883
    %v885 = vrcp.pop %v779
    %v886 = vmul.f32 %v779, %v885
    %v887 = vsub.f32 1.0, %v886
    %v888 = vmul.f32 %v885, %v887
    %v889 = vadd.f32 %v885, %v888
    %vm890 = vweird.f32 %v779
    %vm891 = vweird.f32 %v885
    %vm892 = vmor %vm890, %vm891
    %v893 = vsel %vm892, %v885, %v889
    %v894 = vand.u32 2147483647, %v779
    %vm895 = vcmp.eq.f32.partialorder %v894, 8.507059e+37
    %v896 = vand.u32 %v779, 2147483648
    %v897 = vor.u32 1.1754944e-38, %v896
    %v898 = vsel %vm895, %v897, %v893
    %v899 = vmul.f32 1.0, %v898
    %v900 = vpack.c.bf16 %v794, %v794
    %v901 = vpack.c.bf16 %v809, %v809
    %v902 = vpack.c.bf16 %v824, %v824
    %v903 = vpack.c.bf16 %v839, %v839
    %v904 = vpack.c.bf16 %v854, %v854
    %v905 = vpack.c.bf16 %v869, %v869
    %v906 = vpack.c.bf16 %v884, %v884
    %v907 = vpack.c.bf16 %v899, %v899
    %908 = vst [vmem:[%s7] sm:$0xf] %v900
    %909 = vst [vmem:[%s7 + $0x4] sm:$0xf] %v901
    %910 = vst [vmem:[%s7 + $0x8] sm:$0xf] %v902
    %911 = vst [vmem:[%s7 + $0xc] sm:$0xf] %v903
    %912 = vst [vmem:[%s7 + $0x10] sm:$0xf] %v904
    %913 = vst [vmem:[%s7 + $0x14] sm:$0xf] %v905
    %914 = vst [vmem:[%s7 + $0x18] sm:$0xf] %v906
    %915 = vst [vmem:[%s7 + $0x1c] sm:$0xf] %v907
    // Predicated region
    $region38: #{pamlp_forward.1} parent=1 // pred_check
      _
    $region39: #{pamlp_forward.1} parent=1 // pred_check_branch
      %917 = sbr.rel (0) target = $region41
    $region40: #{pamlp_forward.1} parent=1 // pred_region
      _
    $region41: #{pamlp_forward.1} parent=1 // pred_fallthru
      _
    // Predicated region
    $region42: #{pamlp_forward.1} parent=1 // pred_check
      _
    $region43: #{pamlp_forward.1} parent=1 // pred_check_branch
      %919 = sbr.rel (0) target = $region45
    $region44: #{pamlp_forward.1} parent=1 // pred_region
      _
    $region45: #{pamlp_forward.1} parent=1 // pred_fallthru
      _
    %920 = vsyncpa [#allocation3], 1
    %921 = vsyncpa [#allocation5], 1

</llo_original>
